<compile_context>
chip_gen: v5e
topology: v5e:2x2
jax: 0.10.0
libtpu: 0.0.40
codegen_flags: <defaults>
</compile_context>

<pallas_src>
import functools

import numpy as np
import jax
import jax.numpy as jnp
from jax.experimental import pallas as pl
from jax.experimental.pallas import tpu as pltpu

_VMEM_LIMIT_BYTES = 32 * 1024 * 1024     # safe on v5e/v6e (128 MiB phys) and v7x (64 MiB phys)
_PAIR_TILE_BYTES = 2 * 1024 * 1024       # per-input block; 2 inputs x 2 buffers = 8 MiB
_FUSED_TILE_BYTES = 1 * 1024 * 1024      # per-input block; 4 inputs x 2 buffers = 8 MiB
_CE_TILE_BYTES = 2 * 1024 * 1024
_MAX_TILE_ROWS = 8192
_CE_MAX_TILE_ROWS = 2048                 # keeps the (T,1)->(1,T) lane relayout modest


def _compiler_params(semantics=("parallel",)):
    return pltpu.CompilerParams(dimension_semantics=semantics,
                                vmem_limit_bytes=_VMEM_LIMIT_BYTES)


def _round_up(x, m):
    return ((x + m - 1) // m) * m


def _pick_tile_rows(n_rows, n_cols, itemsize, target_bytes, max_rows):
    """Largest row tile whose (rows, n_cols) block stays near target_bytes,
    rounded for lane/sublane friendliness and never (much) larger than the data."""
    t = max(8, target_bytes // max(1, n_cols * itemsize))
    t = (t // 128) * 128 if t >= 128 else (t // 8) * 8
    t = min(t, max_rows)
    cap = n_rows if n_rows <= 8 else _round_up(n_rows, 8)
    return max(1, min(t, cap))


def _xlogx(p):
    # x*log(x) with the torch.xlogy convention: 0*log(0) == 0
    safe = jnp.where(p > 0, p, 1.0)
    return jnp.where(p > 0, p * jnp.log(safe), 0.0)


def _contrib(mode, x, y):
    """Element-wise contribution of the requested loss (f32, same shape as x)."""
    if mode == "l1":                       # nn.L1Loss (sum part)
        return jnp.abs(x - y)
    if mode == "mse":                      # nn.MSELoss
        return (x - y) * (x - y)
    if mode == "gauss":                    # nn.GaussianNLLLoss with var == 1
        return 0.5 * (x - y) * (x - y)
    if mode == "kl":                       # nn.KLDivLoss: t*(log t - input)
        return _xlogx(y) - y * x
    if mode == "soft_kld":                 # kl_div(log_softmax(x), y), log-softmax fused
        m = jnp.max(x, axis=-1, keepdims=True)
        lse = m + jnp.log(jnp.sum(jnp.exp(x - m), axis=-1, keepdims=True))
        return _xlogx(y) - y * (x - lse)
    if mode == "jsd":                      # 0.5*(kl(m,p)+kl(m,q)), m=(p+q)/2
        mid = 0.5 * (x + y)
        return 0.5 * ((_xlogx(x) - x * mid) + (_xlogx(y) - y * mid))
    raise ValueError(mode)


def _tile_partial_sum(mode, x_ref, y_ref, n_rows, tile_rows, need_mask):
    x = x_ref[...].astype(jnp.float32)
    y = y_ref[...].astype(jnp.float32)
    c = _contrib(mode, x, y)
    if need_mask:  # last tile overruns the row count -> zero the out-of-range rows
        t, ncols = c.shape
        row = pl.program_id(0) * tile_rows + jax.lax.broadcasted_iota(jnp.int32, (t, ncols), 0)
        c = jnp.where(row < n_rows, c, 0.0)
    return jnp.sum(c)


# ---------------------------------------------------------------------------
# Kernels
# ---------------------------------------------------------------------------
def _pairwise_kernel(x_ref, y_ref, o_ref, *, mode, n_rows, tile_rows, need_mask):
    val = _tile_partial_sum(mode, x_ref, y_ref, n_rows, tile_rows, need_mask)
    o_ref[...] = jnp.full((1, 1), val, dtype=jnp.float32)


def _pairwise2_kernel(x1_ref, y1_ref, x2_ref, y2_ref, o1_ref, o2_ref, *,
                      modes, n_rows, tile_rows, need_mask):
    v1 = _tile_partial_sum(modes[0], x1_ref, y1_ref, n_rows, tile_rows, need_mask)
    v2 = _tile_partial_sum(modes[1], x2_ref, y2_ref, n_rows, tile_rows, need_mask)
    o1_ref[...] = jnp.full((1, 1), v1, dtype=jnp.float32)
    o2_ref[...] = jnp.full((1, 1), v2, dtype=jnp.float32)


def _ce_kernel(x_ref, y_ref, ce_ref, psum_ref, *, n_rows, tile_rows, need_mask):
    x = x_ref[...].astype(jnp.float32)          # (T, C) logits
    y = y_ref[...].astype(jnp.float32)          # (T, C) soft targets
    t, c = x.shape
    m = jnp.max(x, axis=-1, keepdims=True)
    lse = m + jnp.log(jnp.sum(jnp.exp(x - m), axis=-1, keepdims=True))
    iota = jax.lax.broadcasted_iota(jnp.int32, (t, c), 1)
    ymax = jnp.max(y, axis=-1, keepdims=True)
    first_idx = jnp.min(jnp.where(y == ymax, iota, c), axis=-1, keepdims=True)
    # slim argmax pick: select-then-max, no one-hot multiply / extra reduction
    picked = jnp.max(jnp.where(iota == first_idx, x, -jnp.inf), axis=-1, keepdims=True)
    ce = lse - picked                           # (T, 1)
    ce_ref[...] = jnp.reshape(ce, (1, t))       # lane-dense per-tile store
    if need_mask:
        row = pl.program_id(0) * tile_rows + jax.lax.broadcasted_iota(jnp.int32, (t, 1), 0)
        ce = jnp.where(row < n_rows, ce, 0.0)
    psum_ref[...] = jnp.full((1, 1), jnp.sum(ce), dtype=jnp.float32)


def _ce_gather_kernel(idx_ref, x_ref, y_ref, o_ref):
    # x_ref / y_ref: (B, 1, C) slab gathered at the masked position; o_ref: (B, 1, 1)
    del idx_ref  # only consumed by the index_maps
    x = x_ref[...].astype(jnp.float32)
    y = y_ref[...].astype(jnp.float32)
    b, _, c = x.shape
    m = jnp.max(x, axis=-1, keepdims=True)
    lse = m + jnp.log(jnp.sum(jnp.exp(x - m), axis=-1, keepdims=True))
    iota = jax.lax.broadcasted_iota(jnp.int32, (b, 1, c), 2)
    ymax = jnp.max(y, axis=-1, keepdims=True)
    first_idx = jnp.min(jnp.where(y == ymax, iota, c), axis=-1, keepdims=True)
    picked = jnp.max(jnp.where(iota == first_idx, x, -jnp.inf), axis=-1, keepdims=True)
    o_ref[...] = lse - picked


# ---------------------------------------------------------------------------
# Wrappers
# ---------------------------------------------------------------------------
def _flatten_rows(x):
    c = x.shape[-1]
    r = int(np.prod(x.shape[:-1])) if x.ndim > 1 else 1
    return jnp.reshape(x, (r, c)), r, c


def _pairwise_sum(mode, x, y):
    """Global sum of the element-wise loss contribution, streamed in row tiles."""
    xf, r, c = _flatten_rows(x)
    yf = jnp.reshape(y, (r, c))
    tile = _pick_tile_rows(r, c, x.dtype.itemsize, _PAIR_TILE_BYTES, _MAX_TILE_ROWS)
    nt = pl.cdiv(r, tile)
    kern = functools.partial(_pairwise_kernel, mode=mode, n_rows=r,
                             tile_rows=tile, need_mask=(nt * tile != r))
    partials = pl.pallas_call(
        kern,
        grid=(nt,),
        in_specs=[pl.BlockSpec((tile, c), lambda i: (i, 0)),
                  pl.BlockSpec((tile, c), lambda i: (i, 0))],
        out_specs=pl.BlockSpec((1, 1), lambda i: (i, 0)),
        out_shape=jax.ShapeDtypeStruct((nt, 1), jnp.float32),
        compiler_params=_compiler_params(),
    )(xf, yf)
    return jnp.sum(partials)


def _pairwise_sum2(mode1, x1, y1, mode2, x2, y2):
    """Fused single pass over two equal-shape operand pairs; returns both raw sums."""
    xf1, r, c = _flatten_rows(x1)
    yf1 = jnp.reshape(y1, (r, c))
    xf2 = jnp.reshape(x2, (r, c))
    yf2 = jnp.reshape(y2, (r, c))
    tile = _pick_tile_rows(r, c, x1.dtype.itemsize, _FUSED_TILE_BYTES, _MAX_TILE_ROWS)
    nt = pl.cdiv(r, tile)
    kern = functools.partial(_pairwise2_kernel, modes=(mode1, mode2), n_rows=r,
                             tile_rows=tile, need_mask=(nt * tile != r))
    in_spec = pl.BlockSpec((tile, c), lambda i: (i, 0))
    out_spec = pl.BlockSpec((1, 1), lambda i: (i, 0))
    s1, s2 = pl.pallas_call(
        kern,
        grid=(nt,),
        in_specs=[in_spec, in_spec, in_spec, in_spec],
        out_specs=[out_spec, out_spec],
        out_shape=[jax.ShapeDtypeStruct((nt, 1), jnp.float32),
                   jax.ShapeDtypeStruct((nt, 1), jnp.float32)],
        compiler_params=_compiler_params(),
    )(xf1, yf1, xf2, yf2)
    return jnp.sum(s1), jnp.sum(s2)


def _two_term_mean(mode1, x1, y1, mode2, x2, y2):
    n1 = float(np.prod(x1.shape))
    n2 = float(np.prod(x2.shape))
    if x1.shape == x2.shape and y1.shape == x1.shape and y2.shape == x2.shape:
        s1, s2 = _pairwise_sum2(mode1, x1, y1, mode2, x2, y2)
    else:
        s1 = _pairwise_sum(mode1, x1, y1)
        s2 = _pairwise_sum(mode2, x2, y2)
    return s1 / n1, s2 / n2


def _ce_per_element(logits, soft_target):
    """Per-position CE (reduction='none') vs argmax(soft_target), plus the total
    CE sum folded into the kernel as a second scalar output."""
    lead = logits.shape[:-1]
    c = logits.shape[-1]
    r = int(np.prod(lead)) if lead else 1
    xf = jnp.reshape(logits, (r, c))
    yf = jnp.reshape(soft_target, (r, c))
    tile = _pick_tile_rows(r, c, logits.dtype.itemsize, _CE_TILE_BYTES, _CE_MAX_TILE_ROWS)
    nt = pl.cdiv(r, tile)
    kern = functools.partial(_ce_kernel, n_rows=r, tile_rows=tile,
                             need_mask=(nt * tile != r))
    ce_tiles, psums = pl.pallas_call(
        kern,
        grid=(nt,),
        in_specs=[pl.BlockSpec((tile, c), lambda i: (i, 0)),
                  pl.BlockSpec((tile, c), lambda i: (i, 0))],
        out_specs=[pl.BlockSpec((1, tile), lambda i: (i, 0)),
                   pl.BlockSpec((1, 1), lambda i: (i, 0))],
        out_shape=[jax.ShapeDtypeStruct((nt, tile), jnp.float32),
                   jax.ShapeDtypeStruct((nt, 1), jnp.float32)],
        compiler_params=_compiler_params(),
    )(xf, yf)
    component = jnp.reshape(ce_tiles, (nt * tile,))[:r].reshape(lead)
    return component, jnp.sum(psums)


def _ce_masked(logits, soft_target, masked_idx):
    """CE (reduction='none') at the masked sequence positions, gathering the rows
    directly from HBM via scalar-prefetch-driven index_maps (no XLA gather copy)."""
    b, _, c = logits.shape
    idx = jnp.asarray(masked_idx, jnp.int32).reshape(-1)
    n = idx.shape[0]
    grid_spec = pltpu.PrefetchScalarGridSpec(
        num_scalar_prefetch=1,
        grid=(n,),
        in_specs=[pl.BlockSpec((b, 1, c), lambda j, idx_ref: (0, idx_ref[j], 0)),
                  pl.BlockSpec((b, 1, c), lambda j, idx_ref: (0, idx_ref[j], 0))],
        out_specs=pl.BlockSpec((b, 1, 1), lambda j, idx_ref: (0, j, 0)),
    )
    out = pl.pallas_call(
        _ce_gather_kernel,
        grid_spec=grid_spec,
        out_shape=jax.ShapeDtypeStruct((b, n, 1), jnp.float32),
        compiler_params=_compiler_params(("arbitrary",)),
    )(idx, logits, soft_target)
    return out[..., 0]


# ---------------------------------------------------------------------------
# Forward dispatcher mirroring the PyTorch module
# ---------------------------------------------------------------------------
class LossFunctionsAlternatives:
    """JAX/Pallas port of the PyTorch LossFunctionsAlternatives.forward()."""

    def get_dictionaries_to_mask_data(self, c2i, i2c, i2i):
        self.c2i, self.i2c, self.i2i = c2i, i2c, i2i

    def forward(self, method, input, target, forw_per, **kargs):
        # `forw_per` only exists to feed channel-first nn.CrossEntropyLoss in the
        # reference; the Pallas kernels consume the un-permuted (..., C) layout.
        numel = float(np.prod(input.shape))
        if method == "CE":
            comp, total = _ce_per_element(input, target)
            self.component_vals = comp
            # component_vals.sum(-1).mean() == total / prod(all dims except last two)
            denom = float(np.prod(input.shape[:-2])) if input.ndim > 2 else 1.0
            self.loss = total / denom
        elif method == "CEmask":
            self.loss = _ce_masked(input, target, kargs["masked_idx"])  # reduction='none'
        elif method == "L1":
            self.loss = _pairwise_sum("l1", input, target) / numel
        elif method == "KL":
            self.loss = _pairwise_sum("kl", input, target) / numel
        elif method == "MSE":
            self.loss = _pairwise_sum("mse", input, target) / numel
        elif method == "logGauss":
            self.loss = _pairwise_sum("gauss", input, target) / numel
        elif method == "Soft_Label_KLD":
            self.component_vals = _pairwise_sum("soft_kld", input, target) / numel
            self.loss = self.component_vals
        elif method == "JSD":
            self.loss = _pairwise_sum("jsd", input, target) / numel
        elif method == "CustomVariational_1":
            tv, t2 = kargs["variational"], kargs["target2"]
            comp, total = _ce_per_element(input, target)
            self.component_vals1 = comp
            self.component_vals2 = (_pairwise_sum("kl", tv[5], t2)
                                    / float(np.prod(tv[5].shape)))
            self.loss = total / float(np.prod(input.shape[:-1])) + self.component_vals2
        elif method == "Guided_Soft_Label_KLD":
            tv, t2 = kargs["variational"], kargs["target2"]
            a, b = _two_term_mean("soft_kld", input, target, "soft_kld", tv[5], t2)
            self.component_vals1, self.component_vals2 = a, b
            self.loss = a + b
        elif method == "Guided_JSD":
            tv, t2 = kargs["variational"], kargs["target2"]
            a, b = _two_term_mean("jsd", input, target, "jsd", tv[5], t2)
            self.loss = a + b
        elif method == "CustomVariational_2":
            i2, t2 = kargs["input2"], kargs["target2"]
            a, b = _two_term_mean("soft_kld", input, target, "kl", i2, t2)
            self.loss = a + b
        elif method == "FocalLoss":
            # TODO(synk): FocalLoss in the reference uses self.gamma/self.weight/self.reduction,
            # which are never defined there; not implementable as specified.
            self.loss = None
        else:
            self.loss = None
        return self.loss

    __call__ = forward


if __name__ == "__main__":
    key = jax.random.PRNGKey(0)
    B, S, C = 2, 8, 32
    k1, k2, k3, k4, k5 = jax.random.split(key, 5)
    logits = jax.random.normal(k1, (B, S, C), jnp.float32)
    target_probs = jax.nn.softmax(jax.random.normal(k2, (B, S, C), jnp.float32), axis=-1)
    input_probs = jax.nn.softmax(jax.random.normal(k3, (B, S, C), jnp.float32), axis=-1)
    aux_logits = jax.random.normal(k4, (B, S, C), jnp.float32)
    target2_probs = jax.nn.softmax(jax.random.normal(k5, (B, S, C), jnp.float32), axis=-1)
    aux_probs = jax.nn.softmax(aux_logits, axis=-1)
    forw_per = (0, 2, 1)                 # what the PyTorch caller passes for (B, S, C)
    variational = (None, None, None, None, None, aux_logits)
    masked_idx = jnp.array([1, 3, 5, 7], jnp.int32)

    crit = LossFunctionsAlternatives()
    results = {
        "CE": crit("CE", logits, target_probs, forw_per),
        "CEmask": crit("CEmask", logits, target_probs, forw_per, masked_idx=masked_idx),
        "L1": crit("L1", logits, target_probs, forw_per),
        "KL": crit("KL", logits, target_probs, forw_per),
        "MSE": crit("MSE", logits, target_probs, forw_per),
        "logGauss": crit("logGauss", logits, target_probs, forw_per),
        "Soft_Label_KLD": crit("Soft_Label_KLD", logits, target_probs, forw_per),
        "JSD": crit("JSD", input_probs, target_probs, forw_per),
        "CustomVariational_1": crit("CustomVariational_1", logits, target_probs, forw_per,
                                    variational=variational, target2=target2_probs),
        "Guided_Soft_Label_KLD": crit("Guided_Soft_Label_KLD", logits, target_probs, forw_per,
                                      variational=variational, target2=target2_probs),
        "Guided_JSD": crit("Guided_JSD", input_probs, target_probs, forw_per,
                           variational=(None, None, None, None, None, aux_probs),
                           target2=target2_probs),
        "CustomVariational_2": crit("CustomVariational_2", logits, target_probs, forw_per,
                                    input2=aux_logits, target2=target2_probs),
    }
    for v in results.values():
        jax.block_until_ready(v)

    # light correctness checks vs pure-JAX references
    logp = jax.nn.log_softmax(logits, axis=-1)
    amax = jnp.argmax(target_probs, axis=-1)
    ce_full = -jnp.take_along_axis(logp, amax[..., None], axis=-1)[..., 0]
    np.testing.assert_allclose(results["CE"], ce_full.sum(-1).mean(), rtol=1e-5, atol=1e-5)

    logp_m = jax.nn.log_softmax(logits[:, masked_idx], axis=-1)
    amax_m = jnp.argmax(target_probs[:, masked_idx], axis=-1)
    ce_mask_ref = -jnp.take_along_axis(logp_m, amax_m[..., None], axis=-1)[..., 0]
    np.testing.assert_allclose(results["CEmask"], ce_mask_ref, rtol=1e-5, atol=1e-5)

    np.testing.assert_allclose(results["L1"], jnp.mean(jnp.abs(logits - target_probs)),
                               rtol=1e-5, atol=1e-6)
    np.testing.assert_allclose(results["MSE"], jnp.mean((logits - target_probs) ** 2),
                               rtol=1e-5, atol=1e-6)
    np.testing.assert_allclose(results["logGauss"], jnp.mean(0.5 * (logits - target_probs) ** 2),
                               rtol=1e-5, atol=1e-6)

    def _kl_mean(inp, tgt):
        return jnp.mean(jnp.where(tgt > 0, tgt * jnp.log(tgt), 0.0) - tgt * inp)

    np.testing.assert_allclose(results["KL"], _kl_mean(logits, target_probs),
                               rtol=1e-5, atol=1e-6)
    np.testing.assert_allclose(results["Soft_Label_KLD"], _kl_mean(logp, target_probs),
                               rtol=1e-5, atol=1e-6)

    m = 0.5 * (input_probs + target_probs)
    jsd_ref = 0.5 * (_kl_mean(m, input_probs) + _kl_mean(m, target_probs))
    np.testing.assert_allclose(results["JSD"], jsd_ref, rtol=1e-5, atol=1e-6)

    cv1_ref = ce_full.mean() + _kl_mean(aux_logits, target2_probs)
    np.testing.assert_allclose(results["CustomVariational_1"], cv1_ref, rtol=1e-5, atol=1e-5)

    gskld_ref = (_kl_mean(logp, target_probs)
                 + _kl_mean(jax.nn.log_softmax(aux_logits, axis=-1), target2_probs))
    np.testing.assert_allclose(results["Guided_Soft_Label_KLD"], gskld_ref, rtol=1e-5, atol=1e-6)

    m2 = 0.5 * (aux_probs + target2_probs)
    jsd2_ref = 0.5 * (_kl_mean(m2, aux_probs) + _kl_mean(m2, target2_probs))
    np.testing.assert_allclose(results["Guided_JSD"], jsd_ref + jsd2_ref, rtol=1e-5, atol=1e-6)

    cv2_ref = _kl_mean(logp, target_probs) + _kl_mean(aux_logits, target2_probs)
    np.testing.assert_allclose(results["CustomVariational_2"], cv2_ref, rtol=1e-5, atol=1e-6)

    print("KERNEL_OK")
</pallas_src>

<mosaic_0001>
module attributes {stable_mosaic.version = 11 : i64} {
  func.func @_ce_kernel(%arg0: i32, %arg1: memref<16x32xf32, #tpu.memory_space<vmem>>, %arg2: memref<16x32xf32, #tpu.memory_space<vmem>>, %arg3: memref<1x16xf32, #tpu.memory_space<vmem>>, %arg4: memref<1x1xf32, #tpu.memory_space<vmem>>) attributes {dimension_semantics = [#tpu.dimension_semantics<parallel>], iteration_bounds = array<i64: 1>, scalar_prefetch = 0 : i64, scratch_operands = 0 : i64, tpu.core_type = #tpu.core_type<tc>, window_params = [{transform_indices = @transform_0, window_bounds = array<i64: 16, 32>}, {transform_indices = @transform_1, window_bounds = array<i64: 16, 32>}, {transform_indices = @transform_2, window_bounds = array<i64: 1, 16>}, {transform_indices = @transform_3, window_bounds = array<i64: 1, 1>}]} {
    %c0 = arith.constant 0 : index
    %c0_0 = arith.constant 0 : index
    %0 = vector.load %arg1[%c0, %c0_0] : memref<16x32xf32, #tpu.memory_space<vmem>>, vector<16x32xf32>
    %c0_1 = arith.constant 0 : index
    %c0_2 = arith.constant 0 : index
    %1 = vector.load %arg2[%c0_1, %c0_2] : memref<16x32xf32, #tpu.memory_space<vmem>>, vector<16x32xf32>
    %cst = arith.constant dense<0xFF800000> : vector<16xf32>
    %2 = vector.multi_reduction <maximumf>, %0, %cst [1] : vector<16x32xf32> to vector<16xf32>
    %3 = vector.shape_cast %2 : vector<16xf32> to vector<16x1xf32>
    %4 = vector.broadcast %3 : vector<16x1xf32> to vector<16x32xf32>
    %5 = arith.subf %0, %4 : vector<16x32xf32>
    %6 = math.exp %5 : vector<16x32xf32>
    %cst_3 = arith.constant dense<0.000000e+00> : vector<16xf32>
    %7 = vector.multi_reduction <add>, %6, %cst_3 [1] : vector<16x32xf32> to vector<16xf32>
    %8 = vector.shape_cast %7 : vector<16xf32> to vector<16x1xf32>
    %9 = math.log %8 : vector<16x1xf32>
    %10 = arith.addf %3, %9 : vector<16x1xf32>
    %11 = tpu.iota {dimensions = array<i32: 1>} : vector<16x32xi32>
    %cst_4 = arith.constant dense<0xFF800000> : vector<16xf32>
    %12 = vector.multi_reduction <maximumf>, %1, %cst_4 [1] : vector<16x32xf32> to vector<16xf32>
    %13 = vector.shape_cast %12 : vector<16xf32> to vector<16x1xf32>
    %14 = vector.broadcast %13 : vector<16x1xf32> to vector<16x32xf32>
    %15 = arith.cmpf oeq, %1, %14 : vector<16x32xf32>
    %c32_i32 = arith.constant 32 : i32
    %16 = vector.broadcast %c32_i32 : i32 to vector<16x32xi32>
    %17 = arith.select %15, %11, %16 : vector<16x32xi1>, vector<16x32xi32>
    %cst_5 = arith.constant dense<2147483647> : vector<16xi32>
    %18 = vector.multi_reduction <minsi>, %17, %cst_5 [1] : vector<16x32xi32> to vector<16xi32>
    %19 = vector.shape_cast %18 : vector<16xi32> to vector<16x1xi32>
    %20 = vector.broadcast %19 : vector<16x1xi32> to vector<16x32xi32>
    %21 = arith.cmpi eq, %11, %20 : vector<16x32xi32>
    %cst_6 = arith.constant 0xFF800000 : f32
    %22 = vector.broadcast %cst_6 : f32 to vector<16x32xf32>
    %23 = arith.select %21, %0, %22 : vector<16x32xi1>, vector<16x32xf32>
    %cst_7 = arith.constant dense<0xFF800000> : vector<16xf32>
    %24 = vector.multi_reduction <maximumf>, %23, %cst_7 [1] : vector<16x32xf32> to vector<16xf32>
    %25 = vector.shape_cast %24 : vector<16xf32> to vector<16x1xf32>
    %26 = arith.subf %10, %25 : vector<16x1xf32>
    %27 = vector.shape_cast %26 : vector<16x1xf32> to vector<1x16xf32>
    %c0_8 = arith.constant 0 : index
    %c0_9 = arith.constant 0 : index
    %28 = vector.load %arg3[%c0_8, %c0_9] : memref<1x16xf32, #tpu.memory_space<vmem>>, vector<1x16xf32>
    tpu.vector_store %arg3[%c0_8, %c0_9], %27 {strides = array<i32>} : memref<1x16xf32, #tpu.memory_space<vmem>>, vector<1x16xf32>,
    %29 = vector.shape_cast %26 : vector<16x1xf32> to vector<1x16x1xf32>
    %cst_10 = arith.constant dense<0.000000e+00> : vector<1xf32>
    %30 = vector.multi_reduction <add>, %29, %cst_10 [1, 2] : vector<1x16x1xf32> to vector<1xf32>
    %31 = vector.shape_cast %30 : vector<1xf32> to vector<1x1x1xf32>
    %32 = vector.extract %31[0, 0, 0] : f32 from vector<1x1x1xf32>
    %33 = vector.broadcast %32 : f32 to vector<1x1xf32>
    %c0_11 = arith.constant 0 : index
    %c0_12 = arith.constant 0 : index
    %34 = vector.load %arg4[%c0_11, %c0_12] : memref<1x1xf32, #tpu.memory_space<vmem>>, vector<1x1xf32>
    tpu.vector_store %arg4[%c0_11, %c0_12], %33 {strides = array<i32>} : memref<1x1xf32, #tpu.memory_space<vmem>>, vector<1x1xf32>,
    return
  }
  func.func @transform_0(%arg0: i32) -> (i32, i32) {
    %c0_i32 = arith.constant 0 : i32
    %c0_i32_0 = arith.constant 0 : i32
    return %arg0, %c0_i32 : i32, i32
  }
  func.func @transform_1(%arg0: i32) -> (i32, i32) {
    %c0_i32 = arith.constant 0 : i32
    %c0_i32_0 = arith.constant 0 : i32
    return %arg0, %c0_i32 : i32, i32
  }
  func.func @transform_2(%arg0: i32) -> (i32, i32) {
    %c0_i32 = arith.constant 0 : i32
    %c0_i32_0 = arith.constant 0 : i32
    return %arg0, %c0_i32 : i32, i32
  }
  func.func @transform_3(%arg0: i32) -> (i32, i32) {
    %c0_i32 = arith.constant 0 : i32
    %c0_i32_0 = arith.constant 0 : i32
    return %arg0, %c0_i32 : i32, i32
  }
}

</mosaic_0001>

<llo_original>
// kernel: tpu_custom_call.1
$region0: #{tpu_custom_call.1}
  #allocation0 [shape = 'u32[]', space=smem, size = 0x4, offset = 0x4, fixed_abs, tag = 'smem constant byte address 0x4 - core index']
  #allocation1 [shape = 'u32[72,128]{1,0:T(1,128)}', space=vmem, size = 0x9000, scoped, tag = 'internal scratch']
  %s0 = inlined_call_operand.hbm [shape: f32[16,32], index: 0, kind: input, shape index: {}]
  %s1 = inlined_call_operand.hbm [shape: f32[16,32], index: 1, kind: input, shape index: {}]
  %s2 = inlined_call_operand.hbm [shape: f32[1,16], index: 2, kind: output, shape index: {0}]
  %s3 = inlined_call_operand.hbm [shape: f32[1,1], index: 3, kind: output, shape index: {1}]
  %4 = xla_tuple %s2, %s3
  %s5 = sld [smem:[#allocation0]]
  $region34: #{tpu_custom_call.1} parent=0
    _
  %s7 = ssub.s32 1, %s5
  %s8 = scalar_select 0, %s7, %s5
  $region1: #{tpu_custom_call.1} parent=0
    #allocation2 [shape = 'u8[8192]{0}', space=vmem, size = 0x2000, scoped, tag = 'input window, operand 0, single buffered']
    #allocation3 [shape = 's32[1]{0}', space=sflag, size = 0x4, scoped, tag = 'scoped memory for tpu_custom_call.1']
    #allocation4 [shape = 's32[1]{0}', space=sflag, size = 0x4, scoped, tag = 'scoped memory for tpu_custom_call.1']
    #allocation5 [shape = 'u8[8192]{0}', space=vmem, size = 0x2000, scoped, tag = 'input window, operand 1, single buffered']
    #allocation6 [shape = 's32[1]{0}', space=sflag, size = 0x4, scoped, tag = 'scoped memory for tpu_custom_call.1']
    #allocation7 [shape = 'u8[512]{0}', space=vmem, size = 0x400, scoped, tag = 'output window, operand 0, single buffered']
    #allocation8 [shape = 'u8[512]{0}', space=vmem, size = 0x400, scoped, tag = 'output window, operand 1, single buffered']
    #allocation9 [shape = 's32[1]{0}', space=sflag, size = 0x4, scoped, tag = 'scoped memory for tpu_custom_call.1']
    %9 = vsyncpa [#allocation3], 0
    %10 = vsyncpa [#allocation6], 0
    %11 = vsyncpa [#allocation4], 0
    %12 = vsyncpa [#allocation9], 0
    // Predicated region
    $region2: #{tpu_custom_call.1} parent=1 // pred_check
      _
    $region3: #{tpu_custom_call.1} parent=1 // pred_check_branch
      %14 = sbr.rel (0) target = $region5
    $region4: #{tpu_custom_call.1} parent=1 // pred_region
      %16 = vsyncadd [#allocation3], 0
      %s17 = sshll.u32 %s0, 4
      %s18 = int_to_ptr.hbm [resolvable:$true] %s17
      %s19 = sshll.u32 [#allocation2], 4
      %s20 = int_to_ptr.vmem [resolvable:$true] %s19
      %25 = dma.hbm_to_vmem [thread:$0]  %s18, 256, %s20, [#allocation3], 128, 128, 8
    $region5: #{tpu_custom_call.1} parent=1 // pred_fallthru
      _
    // Predicated region
    $region6: #{tpu_custom_call.1} parent=1 // pred_check
      _
    $region7: #{tpu_custom_call.1} parent=1 // pred_check_branch
      %27 = sbr.rel (0) target = $region9
    $region8: #{tpu_custom_call.1} parent=1 // pred_region
      %29 = vsyncadd [#allocation6], 0
      %s30 = sshll.u32 %s1, 4
      %s31 = int_to_ptr.hbm [resolvable:$true] %s30
      %s32 = sshll.u32 [#allocation5], 4
      %s33 = int_to_ptr.vmem [resolvable:$true] %s32
      %38 = dma.hbm_to_vmem [thread:$0]  %s31, 256, %s33, [#allocation6], 128, 128, 8
    $region9: #{tpu_custom_call.1} parent=1 // pred_fallthru
      _
    // Predicated region
    $region10: #{tpu_custom_call.1} parent=1 // pred_check
      _
    $region11: #{tpu_custom_call.1} parent=1 // pred_check_branch
      %40 = sbr.rel (0) target = $region13
    $region12: #{tpu_custom_call.1} parent=1 // pred_region
      %42 = dma.done [#allocation3], 256
    $region13: #{tpu_custom_call.1} parent=1 // pred_fallthru
      _
    // Predicated region
    $region14: #{tpu_custom_call.1} parent=1 // pred_check
      _
    $region15: #{tpu_custom_call.1} parent=1 // pred_check_branch
      %44 = sbr.rel (0) target = $region17
    $region16: #{tpu_custom_call.1} parent=1 // pred_region
      %46 = dma.done [#allocation6], 256
    $region17: #{tpu_custom_call.1} parent=1 // pred_fallthru
      _
    %v47 = vld [vmem:[#allocation2] sm:$0xff]
    %v48 = vld [vmem:[#allocation2 + $0x8] sm:$0xff]
    %v49 = vld [vmem:[#allocation5] sm:$0xff]
    %v50 = vld [vmem:[#allocation5 + $0x8] sm:$0xff]
    %vm51 = vcmask 261120
    %v52 = vsel %vm51, %v47, -inf
    %53 = vmax.xlane.f32.xlu0 %v52
    %v54 = vpop.xlane.xlu0 %53
    %v55 = vsel %vm51, %v48, -inf
    %56 = vmax.xlane.f32.xlu0 %v55
    %v57 = vpop.xlane.xlu0 %56
    %v58 = vsub.f32 %v47, %v54
    %v59 = vsub.f32 %v48, %v57
    %v60 = vmul.f32 %v58, 1.442695
    %v61 = vpow.pop %v60
    %v62 = vmul.f32 %v59, 1.442695
    %v63 = vpow.pop %v62
    %v64 = vsel %vm51, %v61, 0.0
    %65 = vadd.xlane.f32.xlu0 %v64
    %v66 = vpop.xlane.xlu0 %65
    %v67 = vsel %vm51, %v63, 0.0
    %68 = vadd.xlane.f32.xlu0 %v67
    %v69 = vpop.xlane.xlu0 %68
    %v70 = vlog2.pop %v66
    %v71 = vmul.f32 %v70, 0.6931472
    %v72 = vlog2.pop %v69
    %v73 = vmul.f32 %v72, 0.6931472
    %v74 = vadd.f32 %v54, %v71
    %v75 = vadd.f32 %v57, %v73
    %v76 = vlaneseq
    %v77 = vand.u32 %v76, 127
    %v78 = vsel %vm51, %v49, -inf
    %79 = vmax.xlane.f32.xlu0 %v78
    %v80 = vpop.xlane.xlu0 %79
    %v81 = vsel %vm51, %v50, -inf
    %82 = vmax.xlane.f32.xlu0 %v81
    %v83 = vpop.xlane.xlu0 %82
    %vm84 = vcmp.eq.f32.partialorder %v49, %v80
    %vm85 = vcmp.eq.f32.partialorder %v50, %v83
    %v86 = vsel %vm84, %v77, 32
    %v87 = vsel %vm85, %v77, 32
    %v88 = vsel %vm51, %v86, 2147483647
    %v89 = vand.u32 %v88, 65535
    %v90 = vshra.s32 %v88, 16
    %v91 = vcvt.s32.f32 %v89
    %v92 = vcvt.s32.f32 %v90
    %93 = vmin.xlane.f32.xlu0 %v92
    %v94 = vpop.xlane.xlu0 %93
    %vm95 = vcmp.eq.f32.partialorder %v92, %v94
    %v96 = vsel %vm95, %v91, inf
    %97 = vmin.xlane.f32.xlu0 %v96
    %v98 = vpop.xlane.xlu0 %97
    %v99 = vcvt.f32.s32 %v98
    %v100 = vcvt.f32.s32 %v94
    %v101 = vshll.u32 %v100, 16
    %v102 = vadd.s32 %v101, %v99
    %v103 = vsel %vm51, %v87, 2147483647
    %v104 = vand.u32 %v103, 65535
    %v105 = vshra.s32 %v103, 16
    %v106 = vcvt.s32.f32 %v104
    %v107 = vcvt.s32.f32 %v105
    %108 = vmin.xlane.f32.xlu0 %v107
    %v109 = vpop.xlane.xlu0 %108
    %vm110 = vcmp.eq.f32.partialorder %v107, %v109
    %v111 = vsel %vm110, %v106, inf
    %112 = vmin.xlane.f32.xlu0 %v111
    %v113 = vpop.xlane.xlu0 %112
    %v114 = vcvt.f32.s32 %v113
    %v115 = vcvt.f32.s32 %v109
    %v116 = vshll.u32 %v115, 16
    %v117 = vadd.s32 %v116, %v114
    %vm118 = vcmp.eq.s32.totalorder %v77, %v102
    %vm119 = vcmp.eq.s32.totalorder %v77, %v117
    %v120 = vsel %vm118, %v47, -inf
    %v121 = vsel %vm119, %v48, -inf
    %v122 = vsel %vm51, %v120, -inf
    %123 = vmax.xlane.f32.xlu0 %v122
    %v124 = vpop.xlane.xlu0 %123
    %v125 = vsel %vm51, %v121, -inf
    %126 = vmax.xlane.f32.xlu0 %v125
    %v127 = vpop.xlane.xlu0 %126
    %v128 = vsub.f32 %v74, %v124
    %v129 = vsub.f32 %v75, %v127
    %v132 = vperm.slane %v128, %v77
    %v133 = vadd.s32 %v77, 4294967288
    %v134 = vperm.slane %v129, %v133
    %vm135 = vcmask 130112
    %v136 = vsel %vm135, %v134, %v132
    %vm138 = vcmask 122880
    %139 = vst.msk [vmem:[#allocation7] sm:$0x1] %vm138, %v136
    %vm140 = vcmask 7168
    %v141 = vsel %vm140, %v128, 0.0
    %v142 = vsel %vm140, %v129, 0.0
    %v143 = vadd.f32 %v141, %v142
    %144 = vadd.xlane.f32.xlu0 %v143
    %v145 = vpop.xlane.xlu0 %144
    %v146 = vrot.slane %v145, 4
    %v147 = vadd.f32 %v145, %v146
    %v148 = vrot.slane %v147, 2
    %v149 = vadd.f32 %v147, %v148
    %v150 = vrot.slane %v149, 1
    %v151 = vadd.f32 %v149, %v150
    %s152 = vtos %v151
    %v153 = vstv %s152
    %vm154 = vcmask 0
    %155 = vst.msk [vmem:[#allocation8] sm:$0x1] %vm154, %v153
    // Predicated region
    $region18: #{tpu_custom_call.1} parent=1 // pred_check
      _
    $region19: #{tpu_custom_call.1} parent=1 // pred_check_branch
      %157 = sbr.rel (0) target = $region21
    $region20: #{tpu_custom_call.1} parent=1 // pred_region
      %159 = vsyncadd [#allocation4], 0
      %s161 = sshll.u32 [#allocation7], 4
      %s162 = int_to_ptr.vmem [resolvable:$true] %s161
      %s163 = sshll.u32 %s2, 4
      %s164 = int_to_ptr.hbm [resolvable:$true] %s163
      %166 = dma.vmem_to_hbm [thread:$0]  %s162, 16, %s164, [#allocation4]
    $region21: #{tpu_custom_call.1} parent=1 // pred_fallthru
      _
    // Predicated region
    $region22: #{tpu_custom_call.1} parent=1 // pred_check
      _
    $region23: #{tpu_custom_call.1} parent=1 // pred_check_branch
      %168 = sbr.rel (0) target = $region25
    $region24: #{tpu_custom_call.1} parent=1 // pred_region
      %170 = vsyncadd [#allocation9], 0
      %s172 = sshll.u32 [#allocation8], 4
      %s173 = int_to_ptr.vmem [resolvable:$true] %s172
      %s174 = sshll.u32 %s3, 4
      %s175 = int_to_ptr.hbm [resolvable:$true] %s174
      %177 = dma.vmem_to_hbm [thread:$0]  %s173, 16, %s175, [#allocation9]
    $region25: #{tpu_custom_call.1} parent=1 // pred_fallthru
      _
    // Predicated region
    $region26: #{tpu_custom_call.1} parent=1 // pred_check
      _
    $region27: #{tpu_custom_call.1} parent=1 // pred_check_branch
      %179 = sbr.rel (0) target = $region29
    $region28: #{tpu_custom_call.1} parent=1 // pred_region
      %181 = dma.done [#allocation4], 16
    $region29: #{tpu_custom_call.1} parent=1 // pred_fallthru
      _
    // Predicated region
    $region30: #{tpu_custom_call.1} parent=1 // pred_check
      _
    $region31: #{tpu_custom_call.1} parent=1 // pred_check_branch
      %183 = sbr.rel (0) target = $region33
    $region32: #{tpu_custom_call.1} parent=1 // pred_region
      %185 = dma.done [#allocation9], 16
    $region33: #{tpu_custom_call.1} parent=1 // pred_fallthru
      _
    %186 = vsyncpa [#allocation3], 1
    %187 = vsyncpa [#allocation6], 1
    %188 = vsyncpa [#allocation4], 1
    %189 = vsyncpa [#allocation9], 1

</llo_original>
